<compile_context>
chip_gen: v5e
topology: v5e:2x2
jax: 0.10.0
libtpu: 0.0.40
codegen_flags: <defaults>
</compile_context>

<pallas_src>
import jax
import jax.numpy as jnp
from jax.experimental import pallas as pl
from jax.experimental.pallas import tpu as pltpu


_LANES = 512  # lane-dense last dim (multiple of 128)


def _chain_runner_kernel(gain_ref, x_ref, y_ref, bad_ref):
    # gain_ref: (1,) float32 in SMEM -- the chain's `vol` parameter.
    # x_ref / y_ref: (block_rows, _LANES) tile of the flattened clip (VMEM).
    # bad_ref: (1, 1) float32 per-block flag in SMEM; > 0 means non-finite seen.
    x = x_ref[...]
    gain = gain_ref[0].astype(x.dtype)

    # --- synthetic effect chain: sox `vol` gain ---
    # TODO(synk): arbitrary sox EffectChain effects (pitch, reverb, tempo, ...)
    # have no clean Pallas equivalent; a `vol` gain stands in for chain.apply().
    y = x * gain
    y_ref[...] = y

    # --- NaN/Inf guard on the (pre-saturation) chain output ---
    nonfinite = jnp.logical_not(jnp.isfinite(y)).astype(jnp.float32)
    bad_ref[0, 0] = jnp.max(nonfinite)


def _round_up(v: int, m: int) -> int:
    return ((v + m - 1) // m) * m


def _tuning():
    """Per-generation (max_block_rows, vmem_limit_bytes, two_tensorcores)."""
    try:
        kind = jax.devices()[0].device_kind.lower()
    except Exception:  # pragma: no cover - defensive, assume older gen
        kind = ""
    if "7" in kind:
        # v7x: ~3.2 TB/s HBM, 64 MiB VMEM, 2 TensorCores -> 4 MiB blocks,
        # raise the scoped-VMEM limit so double-buffered x+y (16 MiB) fits.
        return 2048, 32 * 1024 * 1024, True
    # v5e / v6e: 2 MiB blocks sit at the HBM roofline and the double-buffered
    # x+y (8 MiB) fits under the default scoped-VMEM limit on both.
    return 1024, None, False


def chain_runner(x: jax.Array, gain: float = 0.8) -> jax.Array:
    """Pallas equivalent of ChainRunner.forward(x) for x of shape (C, L)."""
    C, L = x.shape
    total = C * L

    max_block_rows, vmem_limit, two_cores = _tuning()

    # Repack (C, L) into a sublane/lane-dense slab: with small C the original
    # layout uses only a couple of sublanes per vreg and forces masked stores.
    rows = _round_up(pl.cdiv(total, _LANES), 8)

    # Even split across blocks -- never round rows up to a full max-block
    # multiple (that can more than double traffic for short clips).
    n_blocks = pl.cdiv(rows, max_block_rows)
    if two_cores and n_blocks < 2 and rows >= 256:
        n_blocks = 2  # keep the second v7x TensorCore busy on mid-size clips
    block_rows = _round_up(pl.cdiv(rows, n_blocks), 8)
    rows = n_blocks * block_rows
    padded = rows * _LANES

    x_flat = jnp.ravel(x)  # contiguous reshape, no copy
    if padded != total:
        # Zero padding is safe for a pure gain chain: 0*gain is non-finite
        # only when gain itself is, in which case the real samples also trip
        # the fallback.  If additive chain stages are ever added, mask the
        # isfinite check to the first `total` valid elements instead.
        x_flat = jnp.pad(x_flat, (0, padded - total))
    x_slab = x_flat.reshape(rows, _LANES)
    gain_arr = jnp.asarray([gain], dtype=jnp.float32)  # 32-bit SMEM scalar

    itemsize = jnp.dtype(x.dtype).itemsize

    y_slab, bad = pl.pallas_call(
        _chain_runner_kernel,
        out_shape=(
            jax.ShapeDtypeStruct((rows, _LANES), x.dtype),
            jax.ShapeDtypeStruct((n_blocks, 1), jnp.float32),
        ),
        grid=(n_blocks,),
        in_specs=[
            pl.BlockSpec(memory_space=pltpu.SMEM),                   # gain
            pl.BlockSpec((block_rows, _LANES), lambda i: (i, 0)),    # x slab
        ],
        out_specs=(
            pl.BlockSpec((block_rows, _LANES), lambda i: (i, 0)),    # y slab
            pl.BlockSpec((1, 1), lambda i: (i, 0),
                         memory_space=pltpu.SMEM),                   # bad flag
        ),
        compiler_params=pltpu.CompilerParams(
            dimension_semantics=("parallel",),
            vmem_limit_bytes=vmem_limit),
        cost_estimate=pl.CostEstimate(
            flops=padded,
            transcendentals=0,
            bytes_accessed=2 * padded * itemsize),
    )(gain_arr, x_slab)

    if padded != total:
        y = y_slab.reshape(-1)[:total].reshape(C, L)
    else:
        y = y_slab.reshape(C, L)

    # Global fallback (matches the torch module: any NaN/Inf -> return x).
    # lax.cond materializes only one branch instead of a full-array select.
    any_bad = jnp.max(bad) > 0.0
    return jax.lax.cond(any_bad, lambda: x, lambda: y)


def _reference(x, gain=0.8):
    y = x * gain
    bad = jnp.logical_not(jnp.all(jnp.isfinite(y)))
    return jnp.where(bad, x, y)


if __name__ == "__main__":
    key = jax.random.PRNGKey(0)
    channels, length = 2, 2048                       # small audio-like shape
    x = jax.random.normal(key, (channels, length), dtype=jnp.float32)

    # Normal path: finite effect output.
    y = jax.block_until_ready(chain_runner(x, gain=0.8))
    ref = _reference(x, gain=0.8)
    assert y.shape == x.shape and y.dtype == x.dtype
    assert jnp.allclose(y, ref, atol=1e-6), "mismatch vs reference (finite path)"

    # Fallback path: gain = inf makes the chain output non-finite -> return x.
    y_bad = jax.block_until_ready(chain_runner(x, gain=float("inf")))
    assert jnp.allclose(y_bad, x), "NaN/Inf fallback did not return the input"

    print("KERNEL_OK")
</pallas_src>

<mosaic_0001>
module attributes {stable_mosaic.version = 11 : i64} {
  func.func @_chain_runner_kernel(%arg0: i32, %arg1: memref<1xf32, #tpu.memory_space<smem>>, %arg2: memref<8x512xf32, #tpu.memory_space<vmem>>, %arg3: memref<8x512xf32, #tpu.memory_space<vmem>>, %arg4: memref<1x1xf32, #tpu.memory_space<smem>>) attributes {dimension_semantics = [#tpu.dimension_semantics<parallel>], iteration_bounds = array<i64: 1>, scalar_prefetch = 0 : i64, scratch_operands = 0 : i64, tpu.core_type = #tpu.core_type<tc>, window_params = [{transform_indices = @transform_0, window_bounds = array<i64: 1>}, {transform_indices = @transform_1, window_bounds = array<i64: 8, 512>}, {transform_indices = @transform_2, window_bounds = array<i64: 8, 512>}, {transform_indices = @transform_3, window_bounds = array<i64: 1, 1>}]} {
    %c0 = arith.constant 0 : index
    %c0_0 = arith.constant 0 : index
    %0 = vector.load %arg2[%c0, %c0_0] : memref<8x512xf32, #tpu.memory_space<vmem>>, vector<8x512xf32>
    %c0_1 = arith.constant 0 : index
    %1 = memref.load %arg1[%c0_1] : memref<1xf32, #tpu.memory_space<smem>>
    %2 = vector.broadcast %1 : f32 to vector<8x512xf32>
    %3 = arith.mulf %0, %2 : vector<8x512xf32>
    %c0_2 = arith.constant 0 : index
    %c0_3 = arith.constant 0 : index
    %4 = vector.load %arg3[%c0_2, %c0_3] : memref<8x512xf32, #tpu.memory_space<vmem>>, vector<8x512xf32>
    tpu.vector_store %arg3[%c0_2, %c0_3], %3 {strides = array<i32>} : memref<8x512xf32, #tpu.memory_space<vmem>>, vector<8x512xf32>,
    %5 = tpu.weird %3 : vector<8x512xf32> -> vector<8x512xi1>
    %cst = arith.constant dense<true> : vector<8x512xi1>
    %6 = arith.xori %5, %cst : vector<8x512xi1>
    %cst_4 = arith.constant dense<true> : vector<8x512xi1>
    %7 = arith.xori %6, %cst_4 : vector<8x512xi1>
    %8 = arith.extui %7 : vector<8x512xi1> to vector<8x512xi32>
    %9 = arith.sitofp %8 : vector<8x512xi32> to vector<8x512xf32>
    %10 = vector.shape_cast %9 : vector<8x512xf32> to vector<1x8x512xf32>
    %cst_5 = arith.constant dense<0xFF800000> : vector<1xf32>
    %11 = vector.multi_reduction <maximumf>, %10, %cst_5 [1, 2] : vector<1x8x512xf32> to vector<1xf32>
    %12 = vector.shape_cast %11 : vector<1xf32> to vector<1x1x1xf32>
    %13 = vector.extract %12[0, 0, 0] : f32 from vector<1x1x1xf32>
    %c0_6 = arith.constant 0 : index
    %c0_7 = arith.constant 0 : index
    %14 = memref.load %arg4[%c0_6, %c0_7] : memref<1x1xf32, #tpu.memory_space<smem>>
    memref.store %13, %arg4[%c0_6, %c0_7] : memref<1x1xf32, #tpu.memory_space<smem>>
    return
  }
  func.func @transform_0(%arg0: i32) -> i32 {
    %c0_i32 = arith.constant 0 : i32
    %c0_i32_0 = arith.constant 0 : i32
    return %c0_i32 : i32
  }
  func.func @transform_1(%arg0: i32) -> (i32, i32) {
    %c0_i32 = arith.constant 0 : i32
    %c0_i32_0 = arith.constant 0 : i32
    return %arg0, %c0_i32 : i32, i32
  }
  func.func @transform_2(%arg0: i32) -> (i32, i32) {
    %c0_i32 = arith.constant 0 : i32
    %c0_i32_0 = arith.constant 0 : i32
    return %arg0, %c0_i32 : i32, i32
  }
  func.func @transform_3(%arg0: i32) -> (i32, i32) {
    %c0_i32 = arith.constant 0 : i32
    %c0_i32_0 = arith.constant 0 : i32
    return %arg0, %c0_i32 : i32, i32
  }
}

</mosaic_0001>

<llo_original>
// kernel: tpu_custom_call.1
$region0: #{tpu_custom_call.1}
  #allocation0 [shape = 'u32[]', space=smem, size = 0x4, offset = 0x4, fixed_abs, tag = 'smem constant byte address 0x4 - core index']
  #allocation1 [shape = 'u32[72,128]{1,0:T(1,128)}', space=vmem, size = 0x9000, scoped, tag = 'internal scratch']
  #allocation2 [shape = 'f32[1]{0:T(128)S(6)}', space=smem, size = 0x200, scoped, tag = 'scoped memory for tpu_custom_call.1']
  %s0 = inlined_call_operand.<no memory space> [shape: f32[1], index: 0, kind: input, shape index: {}]
  %s1 = inlined_call_operand.hbm [shape: f32[8,512], index: 1, kind: input, shape index: {}]
  %s2 = inlined_call_operand.hbm [shape: f32[8,512], index: 2, kind: output, shape index: {0}]
  %s3 = inlined_call_operand.hbm [shape: f32[1,1], index: 3, kind: output, shape index: {1}]
  %4 = xla_tuple %s2, %s3
  %s5 = sld [smem:[#allocation0]]
  $region30: #{tpu_custom_call.1} parent=0
    _
  %s7 = ssub.s32 1, %s5
  %s8 = scalar_select 0, %s7, %s5
  %9 = sst [smem:[#allocation2]] %s0
  $region1: #{tpu_custom_call.1} parent=0
    #allocation3 [shape = 'u8[16384]{0}', space=vmem, size = 0x4000, scoped, tag = 'input window, operand 1, single buffered']
    #allocation4 [shape = 's32[1]{0}', space=sflag, size = 0x4, scoped, tag = 'scoped memory for tpu_custom_call.1']
    #allocation5 [shape = 's32[1]{0}', space=sflag, size = 0x4, scoped, tag = 'scoped memory for tpu_custom_call.1']
    #allocation6 [shape = 's32[1]{0}', space=sflag, size = 0x4, scoped, tag = 'scoped memory for tpu_custom_call.1']
    #allocation7 [shape = 'u8[16384]{0}', space=vmem, size = 0x4000, scoped, tag = 'output window, operand 0, single buffered']
    #allocation8 [shape = 'u8[512]{0}', space=smem, size = 0x200, scoped, tag = 'output window, operand 1, single buffered']
    %10 = vsyncpa [#allocation4], 0
    %11 = vsyncpa [#allocation5], 0
    %12 = vsyncpa [#allocation6], 0
    // Predicated region
    $region2: #{tpu_custom_call.1} parent=1 // pred_check
      _
    $region3: #{tpu_custom_call.1} parent=1 // pred_check_branch
      %14 = sbr.rel (0) target = $region5
    $region4: #{tpu_custom_call.1} parent=1 // pred_region
      _
    $region5: #{tpu_custom_call.1} parent=1 // pred_fallthru
      _
    // Predicated region
    $region6: #{tpu_custom_call.1} parent=1 // pred_check
      _
    $region7: #{tpu_custom_call.1} parent=1 // pred_check_branch
      %16 = sbr.rel (0) target = $region9
    $region8: #{tpu_custom_call.1} parent=1 // pred_region
      %18 = vsyncadd [#allocation4], 0
      %s20 = sshll.u32 %s1, 4
      %s21 = int_to_ptr.hbm [resolvable:$true] %s20
      %s22 = sshll.u32 [#allocation3], 4
      %s23 = int_to_ptr.vmem [resolvable:$true] %s22
      %25 = dma.hbm_to_vmem [thread:$0]  %s21, 512, %s23, [#allocation4]
    $region9: #{tpu_custom_call.1} parent=1 // pred_fallthru
      _
    // Predicated region
    $region10: #{tpu_custom_call.1} parent=1 // pred_check
      _
    $region11: #{tpu_custom_call.1} parent=1 // pred_check_branch
      %27 = sbr.rel (0) target = $region13
    $region12: #{tpu_custom_call.1} parent=1 // pred_region
      %29 = dma.done [#allocation4], 512
    $region13: #{tpu_custom_call.1} parent=1 // pred_fallthru
      _
    %v30 = vld [vmem:[#allocation3] sm:$0xff]
    %v31 = vld [vmem:[#allocation3 + $0x8] sm:$0xff]
    %v32 = vld [vmem:[#allocation3 + $0x10] sm:$0xff]
    %v33 = vld [vmem:[#allocation3 + $0x18] sm:$0xff]
    %s34 = sld [smem:[#allocation2]]
    %v35 = vstv %s34
    %v36 = vmul.f32 %v30, %v35
    %v37 = vmul.f32 %v31, %v35
    %v38 = vmul.f32 %v32, %v35
    %v39 = vmul.f32 %v33, %v35
    %40 = vst [vmem:[#allocation7] sm:$0xff] %v36
    %41 = vst [vmem:[#allocation7 + $0x8] sm:$0xff] %v37
    %42 = vst [vmem:[#allocation7 + $0x10] sm:$0xff] %v38
    %43 = vst [vmem:[#allocation7 + $0x18] sm:$0xff] %v39
    %vm44 = vweird.f32 %v36
    %vm45 = vweird.f32 %v37
    %vm46 = vweird.f32 %v38
    %vm47 = vweird.f32 %v39
    %v48 = vsel %vm44, 1, 0
    %v49 = vsel %vm45, 1, 0
    %v50 = vsel %vm46, 1, 0
    %v51 = vsel %vm47, 1, 0
    %v52 = vcvt.s32.f32 %v48
    %v53 = vcvt.s32.f32 %v49
    %v54 = vcvt.s32.f32 %v50
    %v55 = vcvt.s32.f32 %v51
    %v56 = vmax.f32 %v52, %v53
    %v57 = vmax.f32 %v54, %v55
    %v58 = vmax.f32 %v56, %v57
    %59 = vmax.xlane.f32.xlu0 %v58
    %v60 = vpop.xlane.xlu0 %59
    %v61 = vrot.slane %v60, 4
    %v62 = vmax.f32 %v60, %v61
    %v63 = vrot.slane %v62, 2
    %v64 = vmax.f32 %v62, %v63
    %v65 = vrot.slane %v64, 1
    %v66 = vmax.f32 %v64, %v65
    %s67 = vtos %v66
    %s68 = scalar_lea.smem [#allocation8], 0
    %69 = sst [smem:[%s68]] %s67
    // Predicated region
    $region14: #{tpu_custom_call.1} parent=1 // pred_check
      _
    $region15: #{tpu_custom_call.1} parent=1 // pred_check_branch
      %71 = sbr.rel (0) target = $region17
    $region16: #{tpu_custom_call.1} parent=1 // pred_region
      %73 = vsyncadd [#allocation5], 0
      %s75 = sshll.u32 [#allocation7], 4
      %s76 = int_to_ptr.vmem [resolvable:$true] %s75
      %s77 = sshll.u32 %s2, 4
      %s78 = int_to_ptr.hbm [resolvable:$true] %s77
      %80 = dma.vmem_to_hbm [thread:$0]  %s76, 512, %s78, [#allocation5]
    $region17: #{tpu_custom_call.1} parent=1 // pred_fallthru
      _
    // Predicated region
    $region18: #{tpu_custom_call.1} parent=1 // pred_check
      _
    $region19: #{tpu_custom_call.1} parent=1 // pred_check_branch
      %82 = sbr.rel (0) target = $region21
    $region20: #{tpu_custom_call.1} parent=1 // pred_region
      %84 = vsyncadd [#allocation6], 0
      %s86 = sshll.u32 %s3, 4
      %s87 = int_to_ptr.hbm [resolvable:$true] %s86
      %89 = dma.smem_to_hbm [#allocation8], 16, %s87, [#allocation6]
    $region21: #{tpu_custom_call.1} parent=1 // pred_fallthru
      _
    // Predicated region
    $region22: #{tpu_custom_call.1} parent=1 // pred_check
      _
    $region23: #{tpu_custom_call.1} parent=1 // pred_check_branch
      %91 = sbr.rel (0) target = $region25
    $region24: #{tpu_custom_call.1} parent=1 // pred_region
      %93 = dma.done [#allocation5], 512
    $region25: #{tpu_custom_call.1} parent=1 // pred_fallthru
      _
    // Predicated region
    $region26: #{tpu_custom_call.1} parent=1 // pred_check
      _
    $region27: #{tpu_custom_call.1} parent=1 // pred_check_branch
      %95 = sbr.rel (0) target = $region29
    $region28: #{tpu_custom_call.1} parent=1 // pred_region
      %97 = dma.done [#allocation6], 16
    $region29: #{tpu_custom_call.1} parent=1 // pred_fallthru
      _
    %98 = sfence
    %99 = vsyncpa [#allocation4], 1
    %100 = vsyncpa [#allocation5], 1
    %101 = vsyncpa [#allocation6], 1

</llo_original>
